<compile_context>
chip_gen: v6e
topology: v6e:2x2x1
jax: 0.10.0
libtpu: 0.0.40
codegen_flags: <defaults>
</compile_context>

<pallas_src>
import functools
import math

import jax
import jax.numpy as jnp
from jax import lax
from jax.experimental import pallas as pl
from jax.experimental.pallas import tpu as pltpu


# ----------------------------- configuration ------------------------------- #
class Cfg:
    feature_dim = 128
    train_class_range = (0, 500)   # C = 500: exercises padding + multi-tile path
    scale = 30.0
    margin = 0.5


EASY_MARGIN = False
GAMMA = 2.0          # FocalLoss gamma
NORM_EPS = 1e-12     # F.normalize eps
_MASK = -1e30        # logit value for padded class columns


# ------------------------------- kernel ------------------------------------ #
def _arc_classifier_kernel(label_ref, emb_ref, w_ref,
                           m_out, l_out, t_out, emb_n_ref,
                           *, s, cos_m, sin_m, th, mm, easy_margin,
                           num_classes, tiles_per_split, matmul_dtype):
    j = pl.program_id(1)                       # class-tile index within split
    B = emb_ref.shape[0]
    tn = w_ref.shape[0]

    # ---- per-split init: normalize embeddings, reset online-softmax state ----
    @pl.when(j == 0)
    def _init():
        emb = emb_ref[...].astype(jnp.float32)                        # (B, D)
        inv = lax.rsqrt(jnp.maximum(
            jnp.sum(emb * emb, axis=1, keepdims=True), NORM_EPS * NORM_EPS))
        emb_n_ref[...] = emb * inv
        m_out[...] = jnp.full(m_out.shape, -jnp.inf, jnp.float32)
        l_out[...] = jnp.zeros(l_out.shape, jnp.float32)
        t_out[...] = jnp.zeros(t_out.shape, jnp.float32)

    # ---- normalize this (tn, D) weight tile along the feature (lane) axis ----
    w = w_ref[...].astype(jnp.float32)
    w_inv = lax.rsqrt(jnp.maximum(
        jnp.sum(w * w, axis=1, keepdims=True), NORM_EPS * NORM_EPS))  # (tn, 1)
    w_n = w * w_inv

    # ---- cosine logits: (B, D) @ (tn, D)^T on the MXU, f32 accumulation ----
    cos_theta = lax.dot_general(
        emb_n_ref[...].astype(matmul_dtype), w_n.astype(matmul_dtype),
        dimension_numbers=(((1,), (1,)), ((), ())),
        preferred_element_type=jnp.float32)                           # (B, tn)
    cos_theta = jnp.clip(cos_theta, -1.0, 1.0)

    # global class-column offset of this tile
    col0 = (pl.program_id(0) * tiles_per_split + j) * tn
    label = label_ref[...]                                            # (B, 1)
    col = lax.broadcasted_iota(jnp.int32, (B, tn), 1) + col0
    onehot = col == label                                             # (B, tn)
    in_tile = (label >= col0) & (label < col0 + tn)                   # (B, 1)
    # TODO(synk): labels are assumed to lie in [0, C); torch CrossEntropyLoss
    # would raise on out-of-range labels, here they silently contribute 0.

    # ArcFace margin on the target logit of rows whose label is in this tile.
    target = jnp.sum(jnp.where(onehot, cos_theta, 0.0), axis=1, keepdims=True)
    sin_theta = jnp.sqrt(jnp.maximum(1.0 - target * target, 0.0))
    cos_theta_m = target * cos_m - sin_theta * sin_m
    if easy_margin:
        final = jnp.where(target > 0.0, cos_theta_m, target)
    else:
        final = jnp.where(target > th, cos_theta_m, target - mm)

    # scatter margin-adjusted logit into the label column, scale, mask padding
    logits = jnp.where(onehot, final, cos_theta) * s                  # (B, tn)
    logits = jnp.where(col < num_classes, logits, _MASK)

    # scaled target logit taken directly from `final` (no second masked reduce)
    t_out[0] += jnp.where(in_tile, final * s, 0.0)

    # ---- online logsumexp accumulation across class tiles of this split ----
    tile_max = jnp.max(logits, axis=1, keepdims=True)                 # (B, 1)
    m_prev = m_out[0]
    m_new = jnp.maximum(m_prev, tile_max)
    alpha = jnp.exp(m_prev - m_new)
    l_out[0] = alpha * l_out[0] + jnp.sum(jnp.exp(logits - m_new),
                                          axis=1, keepdims=True)
    m_out[0] = m_new


# ------------------------------- wrapper ------------------------------------ #
def _round_up(x, m):
    return ((x + m - 1) // m) * m


def arc_classifier_forward(embeddings, label, id_agent, cfg=Cfg,
                           easy_margin=EASY_MARGIN, tn=None,
                           num_class_splits=2, matmul_dtype=None):
    """embeddings (B, D), label (B,) int, id_agent (C, D) -> (1,) focal loss.

    id_agent may be stored in bf16 to halve the dominant HBM stream; the
    matmul then runs in bf16 with f32 accumulation (norms stay f32).
    """
    B, D = embeddings.shape
    C, Dw = id_agent.shape
    assert D == Dw
    w_dtype = id_agent.dtype
    if matmul_dtype is None:
        matmul_dtype = jnp.bfloat16 if w_dtype == jnp.bfloat16 else jnp.float32
    w_itemsize = jnp.dtype(w_dtype).itemsize

    S = max(1, int(num_class_splits))
    if tn is None:
        tn_max = 16384 if w_itemsize <= 2 else 8192
        tn = min(tn_max, _round_up(pl.cdiv(C, S), 128))
    tiles_per_split = pl.cdiv(C, S * tn)
    C_pad = S * tiles_per_split * tn

    # TODO(synk): in real use store id_agent pre-padded (and in bf16) so this
    # pad is a no-op; it copies the weight once when C is not tile-aligned.
    w = id_agent if C_pad == C else jnp.pad(id_agent, ((0, C_pad - C), (0, 0)))
    label_2d = label.astype(jnp.int32).reshape(B, 1)

    m_cfg = cfg.margin
    kernel = functools.partial(
        _arc_classifier_kernel,
        s=float(cfg.scale),
        cos_m=math.cos(m_cfg), sin_m=math.sin(m_cfg),
        th=math.cos(math.pi - m_cfg), mm=math.sin(math.pi - m_cfg) * m_cfg,
        easy_margin=easy_margin,
        num_classes=C,
        tiles_per_split=tiles_per_split,
        matmul_dtype=matmul_dtype,
    )

    part_spec = pl.BlockSpec((1, B, 1), lambda h, j: (h, 0, 0))
    grid_spec = pltpu.PrefetchScalarGridSpec(
        num_scalar_prefetch=0,
        grid=(S, tiles_per_split),
        in_specs=[
            pl.BlockSpec((B, 1), lambda h, j: (0, 0)),                 # label
            pl.BlockSpec((B, D), lambda h, j: (0, 0)),                 # embeddings
            # contiguous (tn, D) weight tile, streamed straight from (C, D)
            # TODO(synk): if xprof shows DMA bubbles at tile boundaries, add
            # pipeline_mode=pl.Buffered(3) here (measure first).
            pl.BlockSpec((tn, D), lambda h, j: (h * tiles_per_split + j, 0)),
        ],
        out_specs=[part_spec, part_spec, part_spec],   # running max / sumexp / target
        scratch_shapes=[pltpu.VMEM((B, D), jnp.float32)],              # emb_n
    )

    part_shape = jax.ShapeDtypeStruct((S, B, 1), jnp.float32)
    vmem_needed = (2 * tn * D * w_itemsize      # weight double buffer
                   + 3 * tn * D * 4             # f32 upcast / normalized tile
                   + 3 * B * D * 4              # embeddings (2 buf) + scratch
                   + 8 * B * tn * 4             # (B, tn) intermediates
                   + 16 * S * B * 4 + (2 << 20))
    compiler_params = pltpu.CompilerParams(
        dimension_semantics=("parallel", "arbitrary"),   # class axis = reduction
        vmem_limit_bytes=int(min(64 << 20, max(32 << 20, vmem_needed))),
    )
    cost = pl.CostEstimate(
        flops=2 * B * D * C_pad + 4 * C_pad * D + 10 * B * C_pad,
        transcendentals=B * C_pad + C_pad + B + 4 * B * S * tiles_per_split,
        bytes_accessed=(C_pad * D * w_itemsize + B * D * 4 + B * 4
                        + 3 * S * B * 4),
    )

    m_p, l_p, t_p = pl.pallas_call(
        kernel,
        out_shape=(part_shape, part_shape, part_shape),
        grid_spec=grid_spec,
        compiler_params=compiler_params,
        cost_estimate=cost,
    )(label_2d, embeddings, w)

    # ---- tiny plain-JAX epilogue: combine per-split partials, mean CE, focal ----
    m = jnp.max(m_p, axis=0)                                  # (B, 1)
    l = jnp.sum(l_p * jnp.exp(m_p - m), axis=0)               # (B, 1)
    lse = m + jnp.log(l)
    tgt = jnp.sum(t_p, axis=0)                                # (B, 1)
    logp = jnp.mean(lse - tgt)          # CrossEntropyLoss(reduction='mean')
    p = jnp.exp(-logp)
    loss = (1.0 - p) ** GAMMA * logp    # FocalLoss applied to the mean CE (as in spec)
    return loss.reshape(1)              # matches losses.unsqueeze(dim=0)


# ---------------------------- pure-JAX reference ----------------------------- #
def arc_classifier_reference(embeddings, label, id_agent, cfg=Cfg,
                             easy_margin=EASY_MARGIN):
    m = cfg.margin
    cos_m, sin_m = math.cos(m), math.sin(m)
    th, mm = math.cos(math.pi - m), math.sin(math.pi - m) * m
    B = embeddings.shape[0]

    emb_n = embeddings / jnp.maximum(
        jnp.linalg.norm(embeddings, axis=1, keepdims=True), NORM_EPS)
    w_n = id_agent / jnp.maximum(
        jnp.linalg.norm(id_agent, axis=1, keepdims=True), NORM_EPS)
    cos_theta = jnp.clip(emb_n @ w_n.T, -1.0, 1.0)
    tgt = cos_theta[jnp.arange(B), label][:, None]
    sin_theta = jnp.sqrt(1.0 - tgt ** 2)
    cos_theta_m = tgt * cos_m - sin_theta * sin_m
    if easy_margin:
        final = jnp.where(tgt > 0, cos_theta_m, tgt)
    else:
        final = jnp.where(tgt > th, cos_theta_m, tgt - mm)
    onehot = jax.nn.one_hot(label, cos_theta.shape[1], dtype=bool)
    logits = jnp.where(onehot, final, cos_theta) * cfg.scale
    logp = jnp.mean(
        jax.nn.logsumexp(logits, axis=1) - logits[jnp.arange(B), label])
    p = jnp.exp(-logp)
    return ((1.0 - p) ** GAMMA * logp).reshape(1)


# --------------------------------- main -------------------------------------- #
if __name__ == "__main__":
    cfg = Cfg
    B = 8
    D = cfg.feature_dim
    C = cfg.train_class_range[1] - cfg.train_class_range[0]   # 500 (not tile-aligned)

    key = jax.random.PRNGKey(0)
    k_emb, k_w, k_lbl = jax.random.split(key, 3)

    embeddings = jax.random.normal(k_emb, (B, D), dtype=jnp.float32)
    # nn.init.normal_(self.id_agent, std=0.01)
    id_agent = 0.01 * jax.random.normal(k_w, (C, D), dtype=jnp.float32)
    label = jax.random.randint(k_lbl, (B,), 0, C, dtype=jnp.int32)

    # f32 weight stream; tn=128 + 2 splits -> 2 tiles/split: exercises the
    # online-logsumexp accumulation, the padded-column mask, and both splits.
    loss = jax.block_until_ready(
        arc_classifier_forward(embeddings, label, id_agent, cfg=cfg,
                               tn=128, num_class_splits=2))
    ref = arc_classifier_reference(embeddings, label, id_agent, cfg=cfg)
    assert loss.shape == (1,)
    assert jnp.allclose(loss, ref, rtol=1e-3, atol=1e-3), (loss, ref)

    # bf16 weight stream (halves HBM bytes of the dominant weight read).
    id_agent_bf16 = id_agent.astype(jnp.bfloat16)
    loss_bf16 = jax.block_until_ready(
        arc_classifier_forward(embeddings, label, id_agent_bf16, cfg=cfg,
                               tn=128, num_class_splits=2))
    ref_bf16 = arc_classifier_reference(
        embeddings, label, id_agent_bf16.astype(jnp.float32), cfg=cfg)
    assert jnp.allclose(loss_bf16, ref_bf16, rtol=5e-2, atol=5e-2), (loss_bf16, ref_bf16)

    print("KERNEL_OK")
</pallas_src>

<mosaic_0001>
module attributes {stable_mosaic.version = 11 : i64} {
  func.func @_arc_classifier_kernel(%arg0: i32, %arg1: i32, %arg2: memref<8x1xi32, #tpu.memory_space<vmem>>, %arg3: memref<8x128xf32, #tpu.memory_space<vmem>>, %arg4: memref<128x128xf32, #tpu.memory_space<vmem>>, %arg5: memref<1x8x1xf32, #tpu.memory_space<vmem>>, %arg6: memref<1x8x1xf32, #tpu.memory_space<vmem>>, %arg7: memref<1x8x1xf32, #tpu.memory_space<vmem>>, %arg8: memref<8x128xf32, #tpu.memory_space<vmem>>) attributes {dimension_semantics = [#tpu.dimension_semantics<parallel>, #tpu.dimension_semantics<arbitrary>], iteration_bounds = array<i64: 2, 2>, scalar_prefetch = 0 : i64, scratch_operands = 1 : i64, tpu.core_type = #tpu.core_type<tc>, window_params = [{pipeline_mode = #tpu.pipeline_mode<synchronous>, transform_indices = @transform_0, window_bounds = array<i64: 8, 1>}, {pipeline_mode = #tpu.pipeline_mode<synchronous>, transform_indices = @transform_1, window_bounds = array<i64: 8, 128>}, {transform_indices = @transform_2, window_bounds = array<i64: 128, 128>}, {transform_indices = @transform_3, window_bounds = array<i64: 1, 8, 1>}, {transform_indices = @transform_4, window_bounds = array<i64: 1, 8, 1>}, {transform_indices = @transform_5, window_bounds = array<i64: 1, 8, 1>}]} {
    %c0_i32 = arith.constant 0 : i32
    %0 = arith.cmpi eq, %arg1, %c0_i32 : i32
    %1 = arith.extui %0 : i1 to i32
    %c0_i32_0 = arith.constant 0 : i32
    %2 = arith.cmpi ne, %1, %c0_i32_0 : i32
    scf.if %2 {
      %c0_43 = arith.constant 0 : index
      %c0_44 = arith.constant 0 : index
      %94 = vector.load %arg3[%c0_43, %c0_44] : memref<8x128xf32, #tpu.memory_space<vmem>>, vector<8x128xf32>
      %95 = arith.mulf %94, %94 : vector<8x128xf32>
      %cst_45 = arith.constant dense<0.000000e+00> : vector<8xf32>
      %96 = vector.multi_reduction <add>, %95, %cst_45 [1] : vector<8x128xf32> to vector<8xf32>
      %97 = vector.shape_cast %96 : vector<8xf32> to vector<8x1xf32>
      %cst_46 = arith.constant 1.000000e-24 : f32
      %98 = vector.broadcast %cst_46 : f32 to vector<8x1xf32>
      %99 = arith.maximumf %97, %98 : vector<8x1xf32>
      %100 = math.rsqrt %99 : vector<8x1xf32>
      %101 = vector.broadcast %100 : vector<8x1xf32> to vector<8x128xf32>
      %102 = arith.mulf %94, %101 : vector<8x128xf32>
      %c0_47 = arith.constant 0 : index
      %c0_48 = arith.constant 0 : index
      %103 = vector.load %arg8[%c0_47, %c0_48] : memref<8x128xf32, #tpu.memory_space<vmem>>, vector<8x128xf32>
      tpu.vector_store %arg8[%c0_47, %c0_48], %102 {strides = array<i32>} : memref<8x128xf32, #tpu.memory_space<vmem>>, vector<8x128xf32>,
      %cst_49 = arith.constant 0xFF800000 : f32
      %104 = vector.broadcast %cst_49 : f32 to vector<1x8x1xf32>
      %c0_50 = arith.constant 0 : index
      %c0_51 = arith.constant 0 : index
      %c0_52 = arith.constant 0 : index
      %105 = vector.load %arg5[%c0_50, %c0_51, %c0_52] : memref<1x8x1xf32, #tpu.memory_space<vmem>>, vector<1x8x1xf32>
      tpu.vector_store %arg5[%c0_50, %c0_51, %c0_52], %104 {strides = array<i32>} : memref<1x8x1xf32, #tpu.memory_space<vmem>>, vector<1x8x1xf32>,
      %cst_53 = arith.constant 0.000000e+00 : f32
      %106 = vector.broadcast %cst_53 : f32 to vector<1x8x1xf32>
      %c0_54 = arith.constant 0 : index
      %c0_55 = arith.constant 0 : index
      %c0_56 = arith.constant 0 : index
      %107 = vector.load %arg6[%c0_54, %c0_55, %c0_56] : memref<1x8x1xf32, #tpu.memory_space<vmem>>, vector<1x8x1xf32>
      tpu.vector_store %arg6[%c0_54, %c0_55, %c0_56], %106 {strides = array<i32>} : memref<1x8x1xf32, #tpu.memory_space<vmem>>, vector<1x8x1xf32>,
      %cst_57 = arith.constant 0.000000e+00 : f32
      %108 = vector.broadcast %cst_57 : f32 to vector<1x8x1xf32>
      %c0_58 = arith.constant 0 : index
      %c0_59 = arith.constant 0 : index
      %c0_60 = arith.constant 0 : index
      %109 = vector.load %arg7[%c0_58, %c0_59, %c0_60] : memref<1x8x1xf32, #tpu.memory_space<vmem>>, vector<1x8x1xf32>
      tpu.vector_store %arg7[%c0_58, %c0_59, %c0_60], %108 {strides = array<i32>} : memref<1x8x1xf32, #tpu.memory_space<vmem>>, vector<1x8x1xf32>,
    } else {
    }
    %c0 = arith.constant 0 : index
    %c0_1 = arith.constant 0 : index
    %3 = vector.load %arg4[%c0, %c0_1] : memref<128x128xf32, #tpu.memory_space<vmem>>, vector<128x128xf32>
    %4 = arith.mulf %3, %3 : vector<128x128xf32>
    %cst = arith.constant dense<0.000000e+00> : vector<128xf32>
    %5 = vector.multi_reduction <add>, %4, %cst [1] : vector<128x128xf32> to vector<128xf32>
    %6 = vector.shape_cast %5 : vector<128xf32> to vector<128x1xf32>
    %cst_2 = arith.constant 1.000000e-24 : f32
    %7 = vector.broadcast %cst_2 : f32 to vector<128x1xf32>
    %8 = arith.maximumf %6, %7 : vector<128x1xf32>
    %9 = math.rsqrt %8 : vector<128x1xf32>
    %10 = vector.broadcast %9 : vector<128x1xf32> to vector<128x128xf32>
    %11 = arith.mulf %3, %10 : vector<128x128xf32>
    %c0_3 = arith.constant 0 : index
    %c0_4 = arith.constant 0 : index
    %12 = vector.load %arg8[%c0_3, %c0_4] : memref<8x128xf32, #tpu.memory_space<vmem>>, vector<8x128xf32>
    %cst_5 = arith.constant dense<0.000000e+00> : vector<8x128xf32>
    %13 = tpu.matmul %12, %11, %cst_5 {dimension_numbers = #tpu.dot_dimension_numbers<[1], [1], [0], [0], [0, 0, 1, 0], [], []>} : vector<8x128xf32>, vector<128x128xf32>, vector<8x128xf32> -> vector<8x128xf32>
    %cst_6 = arith.constant -1.000000e+00 : f32
    %cst_7 = arith.constant 1.000000e+00 : f32
    %14 = vector.broadcast %cst_6 : f32 to vector<8x128xf32>
    %15 = arith.maximumf %14, %13 : vector<8x128xf32>
    %16 = vector.broadcast %cst_7 : f32 to vector<8x128xf32>
    %17 = arith.minimumf %16, %15 : vector<8x128xf32>
    %c2_i32 = arith.constant 2 : i32
    %18 = arith.muli %arg0, %c2_i32 : i32
    %19 = arith.addi %18, %arg1 : i32
    %c128_i32 = arith.constant 128 : i32
    %20 = arith.muli %19, %c128_i32 : i32
    %c0_8 = arith.constant 0 : index
    %c0_9 = arith.constant 0 : index
    %21 = vector.load %arg2[%c0_8, %c0_9] : memref<8x1xi32, #tpu.memory_space<vmem>>, vector<8x1xi32>
    %22 = tpu.iota {dimensions = array<i32: 1>} : vector<8x128xi32>
    %23 = vector.broadcast %20 : i32 to vector<8x128xi32>
    %24 = arith.addi %22, %23 : vector<8x128xi32>
    %25 = vector.broadcast %21 : vector<8x1xi32> to vector<8x128xi32>
    %26 = arith.cmpi eq, %24, %25 : vector<8x128xi32>
    %27 = vector.broadcast %20 : i32 to vector<8x1xi32>
    %28 = arith.cmpi sge, %21, %27 : vector<8x1xi32>
    %c128_i32_10 = arith.constant 128 : i32
    %29 = arith.addi %20, %c128_i32_10 : i32
    %30 = vector.broadcast %29 : i32 to vector<8x1xi32>
    %31 = arith.cmpi slt, %21, %30 : vector<8x1xi32>
    %32 = arith.andi %28, %31 : vector<8x1xi1>
    %cst_11 = arith.constant 0.000000e+00 : f32
    %33 = vector.broadcast %cst_11 : f32 to vector<8x128xf32>
    %34 = arith.select %26, %17, %33 : vector<8x128xi1>, vector<8x128xf32>
    %cst_12 = arith.constant dense<0.000000e+00> : vector<8xf32>
    %35 = vector.multi_reduction <add>, %34, %cst_12 [1] : vector<8x128xf32> to vector<8xf32>
    %36 = vector.shape_cast %35 : vector<8xf32> to vector<8x1xf32>
    %37 = arith.mulf %36, %36 : vector<8x1xf32>
    %cst_13 = arith.constant 1.000000e+00 : f32
    %38 = vector.broadcast %cst_13 : f32 to vector<8x1xf32>
    %39 = arith.subf %38, %37 : vector<8x1xf32>
    %cst_14 = arith.constant 0.000000e+00 : f32
    %40 = vector.broadcast %cst_14 : f32 to vector<8x1xf32>
    %41 = arith.maximumf %39, %40 : vector<8x1xf32>
    %42 = math.sqrt %41 : vector<8x1xf32>
    %cst_15 = arith.constant 0.87758255 : f32
    %43 = vector.broadcast %cst_15 : f32 to vector<8x1xf32>
    %44 = arith.mulf %36, %43 : vector<8x1xf32>
    %cst_16 = arith.constant 0.47942555 : f32
    %45 = vector.broadcast %cst_16 : f32 to vector<8x1xf32>
    %46 = arith.mulf %42, %45 : vector<8x1xf32>
    %47 = arith.subf %44, %46 : vector<8x1xf32>
    %cst_17 = arith.constant -0.87758255 : f32
    %48 = vector.broadcast %cst_17 : f32 to vector<8x1xf32>
    %49 = arith.cmpf ogt, %36, %48 : vector<8x1xf32>
    %cst_18 = arith.constant 0.239712775 : f32
    %50 = vector.broadcast %cst_18 : f32 to vector<8x1xf32>
    %51 = arith.subf %36, %50 : vector<8x1xf32>
    %52 = arith.select %49, %47, %51 : vector<8x1xi1>, vector<8x1xf32>
    %53 = vector.shape_cast %52 : vector<8x1xf32> to vector<8x1xf32>
    %54 = vector.broadcast %53 : vector<8x1xf32> to vector<8x128xf32>
    %55 = arith.select %26, %54, %17 : vector<8x128xi1>, vector<8x128xf32>
    %cst_19 = arith.constant 3.000000e+01 : f32
    %56 = vector.broadcast %cst_19 : f32 to vector<8x128xf32>
    %57 = arith.mulf %55, %56 : vector<8x128xf32>
    %c500_i32 = arith.constant 500 : i32
    %58 = vector.broadcast %c500_i32 : i32 to vector<8x128xi32>
    %59 = arith.cmpi slt, %24, %58 : vector<8x128xi32>
    %cst_20 = arith.constant -1.000000e+30 : f32
    %60 = vector.broadcast %cst_20 : f32 to vector<8x128xf32>
    %61 = arith.select %59, %57, %60 : vector<8x128xi1>, vector<8x128xf32>
    %c0_21 = arith.constant 0 : index
    %c0_22 = arith.constant 0 : index
    %c0_23 = arith.constant 0 : index
    %62 = vector.load %arg7[%c0_21, %c0_22, %c0_23] : memref<1x8x1xf32, #tpu.memory_space<vmem>>, vector<1x8x1xf32>
    %63 = vector.shape_cast %62 : vector<1x8x1xf32> to vector<8x1xf32>
    %cst_24 = arith.constant 3.000000e+01 : f32
    %64 = vector.broadcast %cst_24 : f32 to vector<8x1xf32>
    %65 = arith.mulf %52, %64 : vector<8x1xf32>
    %cst_25 = arith.constant 0.000000e+00 : f32
    %66 = vector.broadcast %cst_25 : f32 to vector<8x1xf32>
    %67 = arith.select %32, %65, %66 : vector<8x1xi1>, vector<8x1xf32>
    %68 = arith.addf %63, %67 : vector<8x1xf32>
    %c0_26 = arith.constant 0 : index
    %c0_27 = arith.constant 0 : index
    %c0_28 = arith.constant 0 : index
    %69 = vector.load %arg7[%c0_26, %c0_27, %c0_28] : memref<1x8x1xf32, #tpu.memory_space<vmem>>, vector<1x8x1xf32>
    %70 = vector.shape_cast %69 : vector<1x8x1xf32> to vector<8x1xf32>
    %71 = vector.shape_cast %68 : vector<8x1xf32> to vector<1x8x1xf32>
    tpu.vector_store %arg7[%c0_26, %c0_27, %c0_28], %71 {strides = array<i32>} : memref<1x8x1xf32, #tpu.memory_space<vmem>>, vector<1x8x1xf32>,
    %cst_29 = arith.constant dense<0xFF800000> : vector<8xf32>
    %72 = vector.multi_reduction <maximumf>, %61, %cst_29 [1] : vector<8x128xf32> to vector<8xf32>
    %73 = vector.shape_cast %72 : vector<8xf32> to vector<8x1xf32>
    %c0_30 = arith.constant 0 : index
    %c0_31 = arith.constant 0 : index
    %c0_32 = arith.constant 0 : index
    %74 = vector.load %arg5[%c0_30, %c0_31, %c0_32] : memref<1x8x1xf32, #tpu.memory_space<vmem>>, vector<1x8x1xf32>
    %75 = vector.shape_cast %74 : vector<1x8x1xf32> to vector<8x1xf32>
    %76 = arith.maximumf %75, %73 : vector<8x1xf32>
    %77 = arith.subf %75, %76 : vector<8x1xf32>
    %78 = math.exp %77 : vector<8x1xf32>
    %c0_33 = arith.constant 0 : index
    %c0_34 = arith.constant 0 : index
    %c0_35 = arith.constant 0 : index
    %79 = vector.load %arg6[%c0_33, %c0_34, %c0_35] : memref<1x8x1xf32, #tpu.memory_space<vmem>>, vector<1x8x1xf32>
    %80 = vector.shape_cast %79 : vector<1x8x1xf32> to vector<8x1xf32>
    %81 = arith.mulf %78, %80 : vector<8x1xf32>
    %82 = vector.broadcast %76 : vector<8x1xf32> to vector<8x128xf32>
    %83 = arith.subf %61, %82 : vector<8x128xf32>
    %84 = math.exp %83 : vector<8x128xf32>
    %cst_36 = arith.constant dense<0.000000e+00> : vector<8xf32>
    %85 = vector.multi_reduction <add>, %84, %cst_36 [1] : vector<8x128xf32> to vector<8xf32>
    %86 = vector.shape_cast %85 : vector<8xf32> to vector<8x1xf32>
    %87 = arith.addf %81, %86 : vector<8x1xf32>
    %c0_37 = arith.constant 0 : index
    %c0_38 = arith.constant 0 : index
    %c0_39 = arith.constant 0 : index
    %88 = vector.load %arg6[%c0_37, %c0_38, %c0_39] : memref<1x8x1xf32, #tpu.memory_space<vmem>>, vector<1x8x1xf32>
    %89 = vector.shape_cast %88 : vector<1x8x1xf32> to vector<8x1xf32>
    %90 = vector.shape_cast %87 : vector<8x1xf32> to vector<1x8x1xf32>
    tpu.vector_store %arg6[%c0_37, %c0_38, %c0_39], %90 {strides = array<i32>} : memref<1x8x1xf32, #tpu.memory_space<vmem>>, vector<1x8x1xf32>,
    %c0_40 = arith.constant 0 : index
    %c0_41 = arith.constant 0 : index
    %c0_42 = arith.constant 0 : index
    %91 = vector.load %arg5[%c0_40, %c0_41, %c0_42] : memref<1x8x1xf32, #tpu.memory_space<vmem>>, vector<1x8x1xf32>
    %92 = vector.shape_cast %91 : vector<1x8x1xf32> to vector<8x1xf32>
    %93 = vector.shape_cast %76 : vector<8x1xf32> to vector<1x8x1xf32>
    tpu.vector_store %arg5[%c0_40, %c0_41, %c0_42], %93 {strides = array<i32>} : memref<1x8x1xf32, #tpu.memory_space<vmem>>, vector<1x8x1xf32>,
    return
  }
  func.func @transform_0(%arg0: i32, %arg1: i32) -> (i32, i32) {
    %c0_i32 = arith.constant 0 : i32
    %c0_i32_0 = arith.constant 0 : i32
    %c0_i32_1 = arith.constant 0 : i32
    return %c0_i32, %c0_i32_0 : i32, i32
  }
  func.func @transform_1(%arg0: i32, %arg1: i32) -> (i32, i32) {
    %c0_i32 = arith.constant 0 : i32
    %c0_i32_0 = arith.constant 0 : i32
    %c0_i32_1 = arith.constant 0 : i32
    return %c0_i32, %c0_i32_0 : i32, i32
  }
  func.func @transform_2(%arg0: i32, %arg1: i32) -> (i32, i32) {
    %c2_i32 = arith.constant 2 : i32
    %0 = arith.muli %arg0, %c2_i32 : i32
    %1 = arith.addi %0, %arg1 : i32
    %c0_i32 = arith.constant 0 : i32
    %c0_i32_0 = arith.constant 0 : i32
    return %1, %c0_i32 : i32, i32
  }
  func.func @transform_3(%arg0: i32, %arg1: i32) -> (i32, i32, i32) {
    %c0_i32 = arith.constant 0 : i32
    %c0_i32_0 = arith.constant 0 : i32
    %c0_i32_1 = arith.constant 0 : i32
    return %arg0, %c0_i32, %c0_i32_0 : i32, i32, i32
  }
  func.func @transform_4(%arg0: i32, %arg1: i32) -> (i32, i32, i32) {
    %c0_i32 = arith.constant 0 : i32
    %c0_i32_0 = arith.constant 0 : i32
    %c0_i32_1 = arith.constant 0 : i32
    return %arg0, %c0_i32, %c0_i32_0 : i32, i32, i32
  }
  func.func @transform_5(%arg0: i32, %arg1: i32) -> (i32, i32, i32) {
    %c0_i32 = arith.constant 0 : i32
    %c0_i32_0 = arith.constant 0 : i32
    %c0_i32_1 = arith.constant 0 : i32
    return %arg0, %c0_i32, %c0_i32_0 : i32, i32, i32
  }
}

</mosaic_0001>

<llo_original>
// kernel: tpu_custom_call.1
$region0: #{tpu_custom_call.1}
  #allocation0 [shape = 'u32[]', space=smem, size = 0x4, offset = 0x4, fixed_abs, tag = 'smem constant byte address 0x4 - core index']
  #allocation1 [shape = 'u32[144,128]{1,0:T(1,128)}', space=vmem, size = 0x12000, scoped, tag = 'internal scratch']
  #allocation2 [shape = 'f32[8,128]{1,0:T(8,128)}', space=vmem, size = 0x1000, scoped, tag = 'scratch operand']
  %s0 = inlined_call_operand.vmem [shape: s32[8,1], index: 0, kind: input, shape index: {}]
  %s1 = inlined_call_operand.vmem [shape: f32[8,128], index: 1, kind: input, shape index: {}]
  %s2 = inlined_call_operand.hbm [shape: f32[512,128], index: 2, kind: input, shape index: {}]
  %s3 = inlined_call_operand.vmem [shape: f32[2,8,1], index: 3, kind: output, shape index: {0}]
  %s4 = inlined_call_operand.vmem [shape: f32[2,8,1], index: 4, kind: output, shape index: {1}]
  %s5 = inlined_call_operand.vmem [shape: f32[2,8,1], index: 5, kind: output, shape index: {2}]
  %6 = xla_tuple %s3, %s4, %s5
  %s7 = sld [smem:[#allocation0]]
  $region69: #{tpu_custom_call.1} parent=0
    _
  %s9 = ssub.s32 1, %s7
  %s10 = scalar_select 0, %s9, %s7
  $region1: #{tpu_custom_call.1} parent=0
    #allocation3 [shape = 'u8[131072]{0}', space=vmem, size = 0x20000, scoped, tag = 'input window, operand 2']
    #allocation4 [shape = 's32[2]{0}', space=sflag, size = 0x8, scoped, tag = 'scoped memory for tpu_custom_call.1']
    %11 = vsyncpa [#allocation4], 0
    %s12 = scalar_lea.sflag [#allocation4], 1
    %13 = vsyncpa %s12, 0
    loop: start=0, step=1, limit=6
    $region2: #{tpu_custom_call.1} parent=1 // loop_pre_header
      _
    $region3: #{tpu_custom_call.1} parent=1 // loop_header
      %s15 = sphi 0, %s19
      %p16 = scmp.ge.s32.totalorder %s15, 6
      %s22 = sphi 0, %s34
      %s23 = sphi 0, %s30
      %s24 = sphi 0, %s22
      %s25 = sphi 0, %s23
      %s26 = sphi 0, %s24
      %s27 = sphi 0, %s25
      %s35 = sphi 0, %s35
      %s37 = sphi 0, %s35
      %s38 = sphi 0, %s37
      %s52 = sphi 0, %s38
      %s56 = sphi 0, %s56
      %s58 = sphi 0, %s56
      %s59 = sphi 0, %s58
      %s73 = sphi 0, %s59
      %s83 = sphi 0, %s85
      %s86 = sphi 0, %s83
      %s87 = sphi 0, %s86
      %s103 = sphi 0, %s87
      %s109 = sphi 0, %s111
      %s112 = sphi 0, %s109
      %s113 = sphi 0, %s112
      %s129 = sphi 0, %s113
      %s135 = sphi 0, %s137
      %s138 = sphi 0, %s135
      %s139 = sphi 0, %s138
      %s155 = sphi 0, %s139
      %s161 = sphi 0, %s163
      %s164 = sphi 0, %s161
      %s165 = sphi 0, %s164
      %s181 = sphi 0, %s165
    $region4: #{tpu_custom_call.1} parent=1 // loop_header_branch
      %18 = sbr.rel (%p16) target = $region8
    $region5: #{tpu_custom_call.1} parent=1 // loop_body
      %s20 = ssub.s32 %s15, 1
      %s21 = ssub.s32 %s15, 2
      %s28 = sadd.s32 1, %s23
      %p29 = scmp.ge.s32.totalorder %s28, 2
      %s30 = scalar_select %p29, 0, %s28
      %s31 = sadd.s32 1, %s22
      %s32 = scalar_select %p29, %s31, %s22
      %p33 = scmp.ge.s32.totalorder %s32, 2
      %s34 = scalar_select %p33, 0, %s32
      %s36 = sadd.s32 %s35, 1
      %p39 = scmp.eq.s32.totalorder %s15, 3
      %p40 = scmp.ne.s32.totalorder %s35, %s37
      %p41 = scmp.eq.s32.totalorder %s15, 0
      %p42 = por %p40, %p41
      %p43 = scmp.ne.s32.totalorder %s35, %s37
      %p44 = scmp.eq.s32.totalorder %s20, 3
      %p45 = por %p43, %p44
      %p46 = scmp.ne.s32.totalorder %s37, %s38
      %p47 = scmp.eq.s32.totalorder %s20, 0
      %p48 = por %p46, %p47
      %p49 = scmp.ne.s32.totalorder %s37, %s38
      %p50 = scmp.eq.s32.totalorder %s21, 3
      %p51 = por %p49, %p50
      %p53 = scmp.ne.s32.totalorder %s38, %s52
      %p54 = scmp.eq.s32.totalorder %s21, 0
      %p55 = por %p53, %p54
      %s57 = sadd.s32 %s56, 1
      %p60 = scmp.eq.s32.totalorder %s15, 3
      %p61 = scmp.ne.s32.totalorder %s56, %s58
      %p62 = scmp.eq.s32.totalorder %s15, 0
      %p63 = por %p61, %p62
      %p64 = scmp.ne.s32.totalorder %s56, %s58
      %p65 = scmp.eq.s32.totalorder %s20, 3
      %p66 = por %p64, %p65
      %p67 = scmp.ne.s32.totalorder %s58, %s59
      %p68 = scmp.eq.s32.totalorder %s20, 0
      %p69 = por %p67, %p68
      %p70 = scmp.ne.s32.totalorder %s58, %s59
      %p71 = scmp.eq.s32.totalorder %s21, 3
      %p72 = por %p70, %p71
      %p74 = scmp.ne.s32.totalorder %s59, %s73
      %p75 = scmp.eq.s32.totalorder %s21, 0
      %p76 = por %p74, %p75
      %s77 = smul.u32 %s22, 2
      %s78 = sadd.s32 %s77, %s23
      %s79 = smul.u32 %s34, 2
      %s80 = sadd.s32 %s79, %s30
      %s81 = ssub.s32 %s78, %s80
      %p82 = scmp.eq.s32.totalorder %s81, 0
      %s84 = sadd.s32 %s83, 1
      %s85 = scalar_select %p82, %s83, %s84
      %p88 = pneg %p82
      %p89 = scmp.eq.s32.totalorder %s15, 3
      %p90 = por %p88, %p89
      %p91 = scmp.ne.s32.totalorder %s83, %s86
      %p92 = scmp.eq.s32.totalorder %s15, 0
      %p93 = por %p91, %p92
      %p94 = scmp.ne.s32.totalorder %s83, %s86
      %p95 = scmp.eq.s32.totalorder %s20, 3
      %p96 = por %p94, %p95
      %p97 = scmp.ne.s32.totalorder %s86, %s87
      %p98 = scmp.eq.s32.totalorder %s20, 0
      %p99 = por %p97, %p98
      %p100 = scmp.ne.s32.totalorder %s86, %s87
      %p101 = scmp.eq.s32.totalorder %s21, 3
      %p102 = por %p100, %p101
      %p104 = scmp.ne.s32.totalorder %s87, %s103
      %p105 = scmp.eq.s32.totalorder %s21, 0
      %p106 = por %p104, %p105
      %s107 = ssub.s32 %s22, %s34
      %p108 = scmp.eq.s32.totalorder %s107, 0
      %s110 = sadd.s32 %s109, 1
      %s111 = scalar_select %p108, %s109, %s110
      %p114 = pneg %p108
      %p115 = scmp.eq.s32.totalorder %s15, 3
      %p116 = por %p114, %p115
      %p117 = scmp.ne.s32.totalorder %s109, %s112
      %p118 = scmp.eq.s32.totalorder %s15, 0
      %p119 = por %p117, %p118
      %p120 = scmp.ne.s32.totalorder %s109, %s112
      %p121 = scmp.eq.s32.totalorder %s20, 3
      %p122 = por %p120, %p121
      %p123 = scmp.ne.s32.totalorder %s112, %s113
      %p124 = scmp.eq.s32.totalorder %s20, 0
      %p125 = por %p123, %p124
      %p126 = scmp.ne.s32.totalorder %s112, %s113
      %p127 = scmp.eq.s32.totalorder %s21, 3
      %p128 = por %p126, %p127
      %p130 = scmp.ne.s32.totalorder %s113, %s129
      %p131 = scmp.eq.s32.totalorder %s21, 0
      %p132 = por %p130, %p131
      %s133 = ssub.s32 %s22, %s34
      %p134 = scmp.eq.s32.totalorder %s133, 0
      %s136 = sadd.s32 %s135, 1
      %s137 = scalar_select %p134, %s135, %s136
      %p140 = pneg %p134
      %p141 = scmp.eq.s32.totalorder %s15, 3
      %p142 = por %p140, %p141
      %p143 = scmp.ne.s32.totalorder %s135, %s138
      %p144 = scmp.eq.s32.totalorder %s15, 0
      %p145 = por %p143, %p144
      %p146 = scmp.ne.s32.totalorder %s135, %s138
      %p147 = scmp.eq.s32.totalorder %s20, 3
      %p148 = por %p146, %p147
      %p149 = scmp.ne.s32.totalorder %s138, %s139
      %p150 = scmp.eq.s32.totalorder %s20, 0
      %p151 = por %p149, %p150
      %p152 = scmp.ne.s32.totalorder %s138, %s139
      %p153 = scmp.eq.s32.totalorder %s21, 3
      %p154 = por %p152, %p153
      %p156 = scmp.ne.s32.totalorder %s139, %s155
      %p157 = scmp.eq.s32.totalorder %s21, 0
      %p158 = por %p156, %p157
      %s159 = ssub.s32 %s22, %s34
      %p160 = scmp.eq.s32.totalorder %s159, 0
      %s162 = sadd.s32 %s161, 1
      %s163 = scalar_select %p160, %s161, %s162
      %p166 = pneg %p160
      %p167 = scmp.eq.s32.totalorder %s15, 3
      %p168 = por %p166, %p167
      %p169 = scmp.ne.s32.totalorder %s161, %s164
      %p170 = scmp.eq.s32.totalorder %s15, 0
      %p171 = por %p169, %p170
      %p172 = scmp.ne.s32.totalorder %s161, %s164
      %p173 = scmp.eq.s32.totalorder %s20, 3
      %p174 = por %p172, %p173
      %p175 = scmp.ne.s32.totalorder %s164, %s165
      %p176 = scmp.eq.s32.totalorder %s20, 0
      %p177 = por %p175, %p176
      %p178 = scmp.ne.s32.totalorder %s164, %s165
      %p179 = scmp.eq.s32.totalorder %s21, 3
      %p180 = por %p178, %p179
      %p182 = scmp.ne.s32.totalorder %s165, %s181
      %p183 = scmp.eq.s32.totalorder %s21, 0
      %p184 = por %p182, %p183
      %p185 = scmp.le.s32.totalorder 1, %s15
      %p186 = scmp.lt.s32.totalorder %s15, 5
      %p187 = pnand %p185, %p186
      %p188 = pneg %p187
      // Predicated region
      $region9: #{tpu_custom_call.1} parent=5 // pred_check
        _
      $region10: #{tpu_custom_call.1} parent=5 // pred_check_branch
        %190 = sbr.rel (%p187) target = $region12
      $region11: #{tpu_custom_call.1} parent=5 // pred_region
        %s191 = ssub.s32 %s15, 1
        // Predicated region
        $region13: #{tpu_custom_call.1} parent=11 // pred_check
          %p192 = pneg %p48
        $region14: #{tpu_custom_call.1} parent=11 // pred_check_branch
          %194 = sbr.rel (%p192) target = $region16
        $region15: #{tpu_custom_call.1} parent=11 // pred_region
          _
        $region16: #{tpu_custom_call.1} parent=11 // pred_fallthru
          _
        // Predicated region
        $region17: #{tpu_custom_call.1} parent=11 // pred_check
          %p195 = pneg %p69
        $region18: #{tpu_custom_call.1} parent=11 // pred_check_branch
          %197 = sbr.rel (%p195) target = $region20
        $region19: #{tpu_custom_call.1} parent=11 // pred_region
          _
        $region20: #{tpu_custom_call.1} parent=11 // pred_fallthru
          _
      $region12: #{tpu_custom_call.1} parent=5 // pred_fallthru
        _
      %p198 = scmp.lt.s32.totalorder %s15, 4
      // Predicated region
      $region21: #{tpu_custom_call.1} parent=5 // pred_check
        %p199 = pneg %p198
      $region22: #{tpu_custom_call.1} parent=5 // pred_check_branch
        %201 = sbr.rel (%p199) target = $region24
      $region23: #{tpu_custom_call.1} parent=5 // pred_region
        // Predicated region
        $region25: #{tpu_custom_call.1} parent=23 // pred_check
          %p202 = pneg %p93
        $region26: #{tpu_custom_call.1} parent=23 // pred_check_branch
          %204 = sbr.rel (%p202) target = $region28
        $region27: #{tpu_custom_call.1} parent=23 // pred_region
          %s205 = sand.u32 %s83, 1
          %s206 = scalar_lea.sflag [#allocation4], %s205
          %s207 = sand.u32 %s83, 1
          %s208 = smul.addr %s207, 128
          %s209 = scalar_lea.vmem [#allocation3], %s208
          %s210 = smul.u32 %s22, 2
          %s211 = sadd.s32 %s210, %s23
          %s212 = smul.u32 16, %s211
          %s214 = ssub.s32 2048, 2048
          %215 = vsyncadd %s206, %s214
          %s216 = smul.addr %s212, 128
          %s217 = scalar_lea.hbm %s2, %s216
          %s218 = sshll.u32 %s209, 4
          %s219 = int_to_ptr.vmem [resolvable:$true] %s218
          %224 = dma.hbm_to_vmem [thread:$0]  %s217, 2048, %s219, %s206, 128, 128, 8
        $region28: #{tpu_custom_call.1} parent=23 // pred_fallthru
          _
      $region24: #{tpu_custom_call.1} parent=5 // pred_fallthru
        _
      %p225 = scmp.le.s32.totalorder 1, %s15
      %p226 = scmp.lt.s32.totalorder %s15, 5
      %p227 = pnand %p225, %p226
      %p228 = pneg %p227
      // Predicated region
      $region29: #{tpu_custom_call.1} parent=5 // pred_check
        _
      $region30: #{tpu_custom_call.1} parent=5 // pred_check_branch
        %230 = sbr.rel (%p227) target = $region32
      $region31: #{tpu_custom_call.1} parent=5 // pred_region
        %s231 = ssub.s32 %s15, 1
        %s232 = sand.u32 %s86, 1
        %s233 = scalar_lea.sflag [#allocation4], %s232
        %s234 = sand.u32 %s86, 1
        %s235 = smul.addr %s234, 128
        %s236 = scalar_lea.vmem [#allocation3], %s235
        // Predicated region
        $region33: #{tpu_custom_call.1} parent=31 // pred_check
          %p237 = pneg %p99
        $region34: #{tpu_custom_call.1} parent=31 // pred_check_branch
          %239 = sbr.rel (%p237) target = $region36
        $region35: #{tpu_custom_call.1} parent=31 // pred_region
          %240 = dma.done %s233, 2048
        $region36: #{tpu_custom_call.1} parent=31 // pred_fallthru
          _
        %p241 = pneg %p48
        %p242 = pneg %p45
        %p243 = pneg %p69
        %p244 = pneg %p66
        %s245 = sand.u32 %s86, 1
        %s246 = scalar_lea.sflag [#allocation4], %s245
        %s247 = sand.u32 %s86, 1
        %s248 = smul.addr %s247, 128
        %s249 = scalar_lea.vmem [#allocation3], %s248
        %p250 = pneg %p99
        %p251 = pneg %p96
        %p252 = pneg %p125
        %p253 = pneg %p122
        %p254 = scmp.lt.s32.totalorder %s24, 1
        %s255 = scalar_select %p254, %s24, 1
        %s256 = smul.addr %s255, 8
        %s257 = scalar_lea.vmem %s3, %s256
        %p258 = pneg %p151
        %p259 = pneg %p148
        %p260 = scmp.lt.s32.totalorder %s24, 1
        %s261 = scalar_select %p260, %s24, 1
        %s262 = smul.addr %s261, 8
        %s263 = scalar_lea.vmem %s4, %s262
        %p264 = pneg %p177
        %p265 = pneg %p174
        %p266 = scmp.lt.s32.totalorder %s24, 1
        %s267 = scalar_select %p266, %s24, 1
        %s268 = smul.addr %s267, 8
        %s269 = scalar_lea.vmem %s5, %s268
        %s270 = smul.u32 %s24, 2
        %s271 = sadd.s32 %s270, %s25
        %s272 = smul.u32 16, %s271
        %p273 = scmp.lt.s32.totalorder %s24, 1
        %s274 = scalar_select %p273, %s24, 1
        %s275 = smul.addr %s274, 8
        %s276 = scalar_lea.vmem %s3, %s275
        %p277 = scmp.lt.s32.totalorder %s24, 1
        %s278 = scalar_select %p277, %s24, 1
        %s279 = smul.addr %s278, 8
        %s280 = scalar_lea.vmem %s4, %s279
        %p281 = scmp.lt.s32.totalorder %s24, 1
        %s282 = scalar_select %p281, %s24, 1
        %s283 = smul.addr %s282, 8
        %s284 = scalar_lea.vmem %s5, %s283
        %p285 = scmp.eq.s32.totalorder %s25, 0
        // Predicated region
        $region37: #{tpu_custom_call.1} parent=31 // pred_check
          %p286 = pneg %p285
        $region38: #{tpu_custom_call.1} parent=31 // pred_check_branch
          %288 = sbr.rel (%p286) target = $region40
        $region39: #{tpu_custom_call.1} parent=31 // pred_region
          %v289 = vld [vmem:[%s1] sm:$0xff]
          %v290 = vmul.f32 %v289, %v289
          %291 = vadd.xlane.f32.xlu0 %v290
          %v292 = vpop.xlane.xlu0 %291
          %v293 = vmax.f32 %v292, 1e-24
          %v294 = vrsqrt.pop %v293
          %v295 = vmul.f32 %v289, %v294
          %296 = vst [vmem:[#allocation2] sm:$0xff] %v295
          %vm297 = vcmask 7168
          %298 = vst.msk [vmem:[%s276] sm:$0xff] %vm297, -inf
          %299 = vst.msk [vmem:[%s280] sm:$0xff] %vm297, 0.0
          %300 = vst.msk [vmem:[%s284] sm:$0xff] %vm297, 0.0
        $region40: #{tpu_custom_call.1} parent=31 // pred_fallthru
          _
        %v301 = vld [vmem:[%s236] sm:$0xff]
        %v302 = vld [vmem:[%s236 + $0x8] sm:$0xff]
        %v303 = vld [vmem:[%s236 + $0x10] sm:$0xff]
        %v304 = vld [vmem:[%s236 + $0x18] sm:$0xff]
        %v305 = vld [vmem:[%s236 + $0x20] sm:$0xff]
        %v306 = vld [vmem:[%s236 + $0x28] sm:$0xff]
        %v307 = vld [vmem:[%s236 + $0x30] sm:$0xff]
        %v308 = vld [vmem:[%s236 + $0x38] sm:$0xff]
        %v309 = vld [vmem:[%s236 + $0x40] sm:$0xff]
        %v310 = vld [vmem:[%s236 + $0x48] sm:$0xff]
        %v311 = vld [vmem:[%s236 + $0x50] sm:$0xff]
        %v312 = vld [vmem:[%s236 + $0x58] sm:$0xff]
        %v313 = vld [vmem:[%s236 + $0x60] sm:$0xff]
        %v314 = vld [vmem:[%s236 + $0x68] sm:$0xff]
        %v315 = vld [vmem:[%s236 + $0x70] sm:$0xff]
        %v316 = vld [vmem:[%s236 + $0x78] sm:$0xff]
        %v317 = vmul.f32 %v301, %v301
        %v318 = vmul.f32 %v302, %v302
        %v319 = vmul.f32 %v303, %v303
        %v320 = vmul.f32 %v304, %v304
        %v321 = vmul.f32 %v305, %v305
        %v322 = vmul.f32 %v306, %v306
        %v323 = vmul.f32 %v307, %v307
        %v324 = vmul.f32 %v308, %v308
        %v325 = vmul.f32 %v309, %v309
        %v326 = vmul.f32 %v310, %v310
        %v327 = vmul.f32 %v311, %v311
        %v328 = vmul.f32 %v312, %v312
        %v329 = vmul.f32 %v313, %v313
        %v330 = vmul.f32 %v314, %v314
        %v331 = vmul.f32 %v315, %v315
        %v332 = vmul.f32 %v316, %v316
        %333 = vadd.xlane.f32.xlu0 %v317
        %v334 = vpop.xlane.xlu0 %333
        %335 = vadd.xlane.f32.xlu0 %v318
        %v336 = vpop.xlane.xlu0 %335
        %337 = vadd.xlane.f32.xlu0 %v319
        %v338 = vpop.xlane.xlu0 %337
        %339 = vadd.xlane.f32.xlu0 %v320
        %v340 = vpop.xlane.xlu0 %339
        %341 = vadd.xlane.f32.xlu0 %v321
        %v342 = vpop.xlane.xlu0 %341
        %343 = vadd.xlane.f32.xlu0 %v322
        %v344 = vpop.xlane.xlu0 %343
        %345 = vadd.xlane.f32.xlu0 %v323
        %v346 = vpop.xlane.xlu0 %345
        %347 = vadd.xlane.f32.xlu0 %v324
        %v348 = vpop.xlane.xlu0 %347
        %349 = vadd.xlane.f32.xlu0 %v325
        %v350 = vpop.xlane.xlu0 %349
        %351 = vadd.xlane.f32.xlu0 %v326
        %v352 = vpop.xlane.xlu0 %351
        %353 = vadd.xlane.f32.xlu0 %v327
        %v354 = vpop.xlane.xlu0 %353
        %355 = vadd.xlane.f32.xlu0 %v328
        %v356 = vpop.xlane.xlu0 %355
        %357 = vadd.xlane.f32.xlu0 %v329
        %v358 = vpop.xlane.xlu0 %357
        %359 = vadd.xlane.f32.xlu0 %v330
        %v360 = vpop.xlane.xlu0 %359
        %361 = vadd.xlane.f32.xlu0 %v331
        %v362 = vpop.xlane.xlu0 %361
        %363 = vadd.xlane.f32.xlu0 %v332
        %v364 = vpop.xlane.xlu0 %363
        %v365 = vmax.f32 %v334, 1e-24
        %v366 = vmax.f32 %v336, 1e-24
        %v367 = vmax.f32 %v338, 1e-24
        %v368 = vmax.f32 %v340, 1e-24
        %v369 = vmax.f32 %v342, 1e-24
        %v370 = vmax.f32 %v344, 1e-24
        %v371 = vmax.f32 %v346, 1e-24
        %v372 = vmax.f32 %v348, 1e-24
        %v373 = vmax.f32 %v350, 1e-24
        %v374 = vmax.f32 %v352, 1e-24
        %v375 = vmax.f32 %v354, 1e-24
        %v376 = vmax.f32 %v356, 1e-24
        %v377 = vmax.f32 %v358, 1e-24
        %v378 = vmax.f32 %v360, 1e-24
        %v379 = vmax.f32 %v362, 1e-24
        %v380 = vmax.f32 %v364, 1e-24
        %v381 = vrsqrt.pop %v365
        %v382 = vrsqrt.pop %v366
        %v383 = vrsqrt.pop %v367
        %v384 = vrsqrt.pop %v368
        %v385 = vrsqrt.pop %v369
        %v386 = vrsqrt.pop %v370
        %v387 = vrsqrt.pop %v371
        %v388 = vrsqrt.pop %v372
        %v389 = vrsqrt.pop %v373
        %v390 = vrsqrt.pop %v374
        %v391 = vrsqrt.pop %v375
        %v392 = vrsqrt.pop %v376
        %v393 = vrsqrt.pop %v377
        %v394 = vrsqrt.pop %v378
        %v395 = vrsqrt.pop %v379
        %v396 = vrsqrt.pop %v380
        %v397 = vmul.f32 %v301, %v381
        %v398 = vmul.f32 %v302, %v382
        %v399 = vmul.f32 %v303, %v383
        %v400 = vmul.f32 %v304, %v384
        %v401 = vmul.f32 %v305, %v385
        %v402 = vmul.f32 %v306, %v386
        %v403 = vmul.f32 %v307, %v387
        %v404 = vmul.f32 %v308, %v388
        %v405 = vmul.f32 %v309, %v389
        %v406 = vmul.f32 %v310, %v390
        %v407 = vmul.f32 %v311, %v391
        %v408 = vmul.f32 %v312, %v392
        %v409 = vmul.f32 %v313, %v393
        %v410 = vmul.f32 %v314, %v394
        %v411 = vmul.f32 %v315, %v395
        %v412 = vmul.f32 %v316, %v396
        %v413 = vld [vmem:[#allocation2] sm:$0xff]
        %414 = vmatprep.subr.mxu0 0.0
        %415 = vmatpush1.xpose.msra.mxu0 %v412
        %416 = vmatprep.subr.mxu0 0.0
        %417 = vmatpush1.xpose.msra.mxu0 %v411
        %418 = vmatprep.subr.mxu0 0.0
        %419 = vmatpush1.xpose.msra.mxu0 %v410
        %420 = vmatprep.subr.mxu0 0.0
        %421 = vmatpush1.xpose.msra.mxu0 %v409
        %422 = vmatprep.subr.mxu0 0.0
        %423 = vmatpush1.xpose.msra.mxu0 %v408
        %424 = vmatprep.subr.mxu0 0.0
        %425 = vmatpush1.xpose.msra.mxu0 %v407
        %426 = vmatprep.subr.mxu0 0.0
        %427 = vmatpush1.xpose.msra.mxu0 %v406
        %428 = vmatprep.subr.mxu0 0.0
        %429 = vmatpush1.xpose.msra.mxu0 %v405
        %430 = vmatprep.subr.mxu0 0.0
        %431 = vmatpush1.xpose.msra.mxu0 %v404
        %432 = vmatprep.subr.mxu0 0.0
        %433 = vmatpush1.xpose.msra.mxu0 %v403
        %434 = vmatprep.subr.mxu0 0.0
        %435 = vmatpush1.xpose.msra.mxu0 %v402
        %436 = vmatprep.subr.mxu0 0.0
        %437 = vmatpush1.xpose.msra.mxu0 %v401
        %438 = vmatprep.subr.mxu0 0.0
        %439 = vmatpush1.xpose.msra.mxu0 %v400
        %440 = vmatprep.subr.mxu0 0.0
        %441 = vmatpush1.xpose.msra.mxu0 %v399
        %442 = vmatprep.subr.mxu0 0.0
        %443 = vmatpush1.xpose.msra.mxu0 %v398
        %444 = vmatprep.subr.mxu0 0.0
        %445 = vmatpush1.xpose.msra.mxu0 %v397
        %446 = vmatprep.subr.mxu0 0.0
        %447 = vmatpush2.xpose.msra.mxu0 0.0
        %448 = vmatprep.subr.mxu0 0.0
        %449 = vmatpush2.xpose.msra.mxu0 0.0
        %450 = vmatprep.subr.mxu0 0.0
        %451 = vmatpush2.xpose.msra.mxu0 0.0
        %452 = vmatprep.subr.mxu0 0.0
        %453 = vmatpush2.xpose.msra.mxu0 0.0
        %454 = vmatprep.subr.mxu0 0.0
        %455 = vmatpush2.xpose.msra.mxu0 0.0
        %456 = vmatprep.subr.mxu0 0.0
        %457 = vmatpush2.xpose.msra.mxu0 0.0
        %458 = vmatprep.subr.mxu0 0.0
        %459 = vmatpush2.xpose.msra.mxu0 0.0
        %460 = vmatprep.subr.mxu0 0.0
        %461 = vmatpush2.xpose.msra.mxu0 0.0
        %462 = vmatprep.subr.mxu0 0.0
        %463 = vmatpush2.xpose.msra.mxu0 0.0
        %464 = vmatprep.subr.mxu0 0.0
        %465 = vmatpush2.xpose.msra.mxu0 0.0
        %466 = vmatprep.subr.mxu0 0.0
        %467 = vmatpush2.xpose.msra.mxu0 0.0
        %468 = vmatprep.subr.mxu0 0.0
        %469 = vmatpush2.xpose.msra.mxu0 0.0
        %470 = vmatprep.subr.mxu0 0.0
        %471 = vmatpush2.xpose.msra.mxu0 0.0
        %472 = vmatprep.subr.mxu0 0.0
        %473 = vmatpush2.xpose.msra.mxu0 0.0
        %474 = vmatprep.subr.mxu0 0.0
        %475 = vmatpush2.xpose.msra.mxu0 0.0
        %476 = vmatprep.subr.mxu0 0.0
        %477 = vmatpush2.xpose.msra.mxu0 0.0
        %478 = vmatprep.mubr.f32.mxu0 0.0
        %479 = vmatmul.mubr.f32.gmra.mxu0 %v413
        %v480 = vpop.f32.mrf.mxu0
        %v481 = vadd.f32 0.0, %v480
        %v482 = vpop.f32.mrf.mxu0
        %483 = vdwg.mxu0
        %v484 = vmax.f32 %v481, -1.0
        %v485 = vmin.f32 %v484, 1.0
        %s486 = smul.u32 %s24, 2
        %s487 = sadd.s32 %s486, %s25
        %s488 = smul.u32 %s487, 128
        %v489 = vld [vmem:[%s0] sm:$0xff]
        %v490 = vlaneseq
        %v491 = vand.u32 %v490, 127
        %v492 = vstv %s488
        %v493 = vadd.s32 %v491, %v492
        %494 = vset.pattern.permute.xlu0 0
        %495 = vperm.xlu0 %494, %v489
        %v496 = vpop.permute.xlu0 %495
        %vm497 = vcmp.eq.s32.totalorder %v493, %v496
        %vm498 = vcmp.ge.s32.totalorder %v489, %v492
        %s499 = sadd.s32 %s488, 128
        %v500 = vstv %s499
        %vm501 = vcmp.lt.s32.totalorder %v489, %v500
        %vm502 = vmand %vm498, %vm501
        %v503 = vsel %vm497, %v485, 0.0
        %504 = vadd.xlane.f32.xlu0 %v503
        %v505 = vpop.xlane.xlu0 %504
        %v506 = vmul.f32 %v505, %v505
        %v507 = vsub.f32 1.0, %v506
        %v508 = vmax.f32 %v507, 0.0
        %v509 = vrsqrt.pop %v508
        %v510 = vmul.f32 %v508, %v509
        %vm511 = vcmp.eq.f32.partialorder %v508, inf
        %v512 = vsel %vm511, %v508, %v510
        %vm513 = vcmp.eq.f32.partialorder %v508, 0.0
        %v514 = vand.u32 %v508, 2147483648
        %v515 = vsel %vm513, %v514, %v512
        %v516 = vmul.f32 %v505, 0.87758255
        %v517 = vmul.f32 %v515, 0.47942555
        %v518 = vsub.f32 %v516, %v517
        %vm519 = vcmp.gt.f32.partialorder %v505, -0.87758255
        %v520 = vsub.f32 %v505, 0.23971277
        %v521 = vsel %vm519, %v518, %v520
        %v522 = vsel %vm497, %v521, %v485
        %v523 = vmul.f32 %v522, 30.0
        %vm524 = vcmp.lt.s32.totalorder %v493, 500
        %v525 = vsel %vm524, %v523, -1e+30
        %v526 = vld [vmem:[%s284] sm:$0xff]
        %v527 = vmul.f32 %v521, 30.0
        %v528 = vsel %vm502, %v527, 0.0
        %v529 = vadd.f32 %v526, %v528
        %vm530 = vcmask 7168
        %531 = vst.msk [vmem:[%s284] sm:$0xff] %vm530, %v529
        %532 = vmax.xlane.f32.xlu0 %v525
        %v533 = vpop.xlane.xlu0 %532
        %v534 = vld [vmem:[%s276] sm:$0xff]
        %v535 = vmax.f32 %v534, %v533
        %v536 = vsub.f32 %v534, %v535
        %v537 = vmul.f32 %v536, 1.442695
        %v538 = vpow.pop %v537
        %v539 = vld [vmem:[%s280] sm:$0xff]
        %v540 = vmul.f32 %v538, %v539
        %542 = vset.pattern.permute.xlu0 0
        %543 = vperm.xlu0 %542, %v535
        %v544 = vpop.permute.xlu0 %543
        %v546 = vsub.f32 %v525, %v544
        %v547 = vmul.f32 %v546, 1.442695
        %v548 = vpow.pop %v547
        %549 = vadd.xlane.f32.xlu0 %v548
        %v550 = vpop.xlane.xlu0 %549
        %v551 = vadd.f32 %v540, %v550
        %552 = vst.msk [vmem:[%s280] sm:$0xff] %vm530, %v551
        %553 = vst.msk [vmem:[%s276] sm:$0xff] %vm530, %v535
        %p554 = scmp.lt.s32.totalorder %s24, 1
        %s555 = scalar_select %p554, %s24, 1
        %s556 = smul.addr %s555, 8
        %s557 = scalar_lea.vmem %s3, %s556
        %p558 = scmp.lt.s32.totalorder %s24, 1
        %s559 = scalar_select %p558, %s24, 1
        %s560 = smul.addr %s559, 8
        %s561 = scalar_lea.vmem %s4, %s560
        %p562 = scmp.lt.s32.totalorder %s24, 1
        %s563 = scalar_select %p562, %s24, 1
        %s564 = smul.addr %s563, 8
        %s565 = scalar_lea.vmem %s5, %s564
        // Predicated region
        $region41: #{tpu_custom_call.1} parent=31 // pred_check
          %p566 = pneg %p122
        $region42: #{tpu_custom_call.1} parent=31 // pred_check_branch
          %568 = sbr.rel (%p566) target = $region44
        $region43: #{tpu_custom_call.1} parent=31 // pred_region
          _
        $region44: #{tpu_custom_call.1} parent=31 // pred_fallthru
          _
        // Predicated region
        $region45: #{tpu_custom_call.1} parent=31 // pred_check
          %p569 = pneg %p148
        $region46: #{tpu_custom_call.1} parent=31 // pred_check_branch
          %571 = sbr.rel (%p569) target = $region48
        $region47: #{tpu_custom_call.1} parent=31 // pred_region
          _
        $region48: #{tpu_custom_call.1} parent=31 // pred_fallthru
          _
        // Predicated region
        $region49: #{tpu_custom_call.1} parent=31 // pred_check
          %p572 = pneg %p174
        $region50: #{tpu_custom_call.1} parent=31 // pred_check_branch
          %574 = sbr.rel (%p572) target = $region52
        $region51: #{tpu_custom_call.1} parent=31 // pred_region
          _
        $region52: #{tpu_custom_call.1} parent=31 // pred_fallthru
          _
      $region32: #{tpu_custom_call.1} parent=5 // pred_fallthru
        _
      %p575 = scmp.le.s32.totalorder 2, %s15
      // Predicated region
      $region53: #{tpu_custom_call.1} parent=5 // pred_check
        %p576 = pneg %p575
      $region54: #{tpu_custom_call.1} parent=5 // pred_check_branch
        %578 = sbr.rel (%p576) target = $region56
      $region55: #{tpu_custom_call.1} parent=5 // pred_region
        %s579 = ssub.s32 %s15, 2
        // Predicated region
        $region57: #{tpu_custom_call.1} parent=55 // pred_check
          %p580 = pneg %p128
        $region58: #{tpu_custom_call.1} parent=55 // pred_check_branch
          %582 = sbr.rel (%p580) target = $region60
        $region59: #{tpu_custom_call.1} parent=55 // pred_region
          %p583 = scmp.lt.s32.totalorder %s26, 1
          %s584 = scalar_select %p583, %s26, 1
          %s585 = smul.addr %s584, 8
          %s586 = scalar_lea.vmem %s3, %s585
        $region60: #{tpu_custom_call.1} parent=55 // pred_fallthru
          _
        // Predicated region
        $region61: #{tpu_custom_call.1} parent=55 // pred_check
          %p587 = pneg %p154
        $region62: #{tpu_custom_call.1} parent=55 // pred_check_branch
          %589 = sbr.rel (%p587) target = $region64
        $region63: #{tpu_custom_call.1} parent=55 // pred_region
          %p590 = scmp.lt.s32.totalorder %s26, 1
          %s591 = scalar_select %p590, %s26, 1
          %s592 = smul.addr %s591, 8
          %s593 = scalar_lea.vmem %s4, %s592
        $region64: #{tpu_custom_call.1} parent=55 // pred_fallthru
          _
        // Predicated region
        $region65: #{tpu_custom_call.1} parent=55 // pred_check
          %p594 = pneg %p180
        $region66: #{tpu_custom_call.1} parent=55 // pred_check_branch
          %596 = sbr.rel (%p594) target = $region68
        $region67: #{tpu_custom_call.1} parent=55 // pred_region
          %p597 = scmp.lt.s32.totalorder %s26, 1
          %s598 = scalar_select %p597, %s26, 1
          %s599 = smul.addr %s598, 8
          %s600 = scalar_lea.vmem %s5, %s599
        $region68: #{tpu_custom_call.1} parent=55 // pred_fallthru
          _
      $region56: #{tpu_custom_call.1} parent=5 // pred_fallthru
        _
    $region6: #{tpu_custom_call.1} parent=1 // loop_footer
      %s19 = sadd.s32 1, %s15
    $region7: #{tpu_custom_call.1} parent=1 // loop_footer_branch
      %14 = sbr.rel target = $region3
    $region8: #{tpu_custom_call.1} parent=1 // loop_exit
      _
    %601 = vsyncpa [#allocation4], 1
    %s602 = scalar_lea.sflag [#allocation4], 1
    %603 = vsyncpa %s602, 1

</llo_original>
